<compile_context>
chip_gen: v6e
topology: v6e:2x2x1
jax: 0.10.0
libtpu: 0.0.40
codegen_flags: <defaults>
</compile_context>

<pallas_src>
import jax
import jax.numpy as jnp
from jax.experimental import pallas as pl
from jax.experimental.pallas import tpu as pltpu


NOUT = 3        # number of actions
NOUT_PAD = 8    # fc3 output rows padded to a full sublane group
LANE = 128      # TPU lane width


def qnet_kernel(xt_ref, w1_ref, b1_ref, w2_ref, b2_ref, w3_ref, b3_ref, ot_ref):
    """One (4, TM) batch tile of observations -> (NOUT_PAD, TM) Q-values.

    Feature-major layout: the batch lives in the lane dimension, so every
    activation tile is lane-dense and the output store is unmasked.
    """
    # --- fc1 + ReLU: f32 operands (K = 4 -> MXU cost negligible, full x precision)
    h1 = jnp.dot(w1_ref[...], xt_ref[...],
                 preferred_element_type=jnp.float32)           # (64, TM)
    h1 = jnp.maximum(h1 + b1_ref[...], 0.0)

    # --- fc2 + ReLU: bf16 operands on the MXU, f32 accumulation / epilogue
    h2 = jnp.dot(w2_ref[...], h1.astype(w2_ref.dtype),
                 preferred_element_type=jnp.float32)           # (64, TM)
    h2 = jnp.maximum(h2 + b2_ref[...], 0.0)

    # --- fc3 (output rows padded 3 -> 8), no activation
    out = jnp.dot(w3_ref[...], h2.astype(w3_ref.dtype),
                  preferred_element_type=jnp.float32)          # (NOUT_PAD, TM)
    ot_ref[...] = (out + b3_ref[...]).astype(ot_ref.dtype)


def _round_up(n, m):
    return ((n + m - 1) // m) * m


def qnet_forward(x, params, *, block_rows=8192, compute_dtype=jnp.bfloat16):
    """Batched Qnet forward via Pallas. x: (B, 4) f32 -> (B, 3) f32.

    params use PyTorch Linear layout: weight (out_features, in_features),
    bias (out_features,).
    """
    w1, b1, w2, b2, w3, b3 = params
    B, feat = x.shape
    assert feat == w1.shape[1]

    # fc3 rows padded 3 -> 8 so the last matmul / output tile are sublane-aligned.
    w3p = jnp.zeros((NOUT_PAD, w3.shape[1]), jnp.float32).at[:NOUT, :].set(w3)
    b3p = jnp.zeros((NOUT_PAD,), jnp.float32).at[:NOUT].set(b3)

    # Resident operands: fc1 stays f32; fc2/fc3 weights in compute_dtype (bf16,
    # MXU-native); biases as f32 column vectors (broadcast over lanes).
    w1c = w1.astype(jnp.float32)
    w2c = w2.astype(compute_dtype)
    w3c = w3p.astype(compute_dtype)
    b1c = b1.reshape(-1, 1).astype(jnp.float32)
    b2c = b2.reshape(-1, 1).astype(jnp.float32)
    b3c = b3p.reshape(-1, 1).astype(jnp.float32)

    # Feature-major layout: batch in the lane dimension. x streams as f32
    # (no wrapper dtype-cast pass over x).
    xt = x.T                                                   # (4, B) f32

    # Batch tile (lane dim). Small batches: one exact block (lane extent == B
    # equals the full array dim, which satisfies the (8,128) rule). Larger
    # batches: multiple of 128 lanes, capped at ceil(B/2) so there are always
    # >= 2 grid steps (feeds both v7x TensorCores); the partial trailing block
    # is masked by Pallas, so no jnp.pad copy of x is needed.
    if B <= 2 * LANE:
        tm = B
    else:
        tm = min(_round_up(block_rows, LANE),
                 _round_up(pl.cdiv(B, 2), LANE))
        tm = max(tm, LANE)
    n_blocks = pl.cdiv(B, tm)

    # Weights/biases: full-array blocks with a constant index_map -> DMA'd once
    # and held resident in VMEM across all grid steps.
    resident = lambda a: pl.BlockSpec(a.shape, lambda i: (0, 0))

    out_t = pl.pallas_call(
        qnet_kernel,
        out_shape=jax.ShapeDtypeStruct((NOUT_PAD, B), jnp.float32),
        grid=(n_blocks,),
        in_specs=[
            pl.BlockSpec((feat, tm), lambda i: (0, i)),        # x^T: streamed
            resident(w1c), resident(b1c),                      # weights: resident
            resident(w2c), resident(b2c),
            resident(w3c), resident(b3c),
        ],
        out_specs=pl.BlockSpec((NOUT_PAD, tm), lambda i: (0, i)),
        compiler_params=pltpu.CompilerParams(
            dimension_semantics=("parallel",),   # v7x: batch split across both TCs
        ),
    )(xt, w1c, b1c, w2c, b2c, w3c, b3c)

    return out_t[:NOUT, :].T                                   # (B, 3)


def qnet_forward_xla(x, params, *, compute_dtype=jnp.bfloat16):
    """Plain-XLA forward mirroring the kernel numerics (fc1 f32, fc2/fc3 bf16
    operands with f32 accumulation). Use for tiny batches (single act() obs),
    where a Pallas launch is pure fixed overhead."""
    w1, b1, w2, b2, w3, b3 = params
    h = jnp.dot(x, w1.T, preferred_element_type=jnp.float32) + b1
    h = jnp.maximum(h, 0.0)
    h = jnp.dot(h.astype(compute_dtype), w2.T.astype(compute_dtype),
                preferred_element_type=jnp.float32) + b2
    h = jnp.maximum(h, 0.0)
    out = jnp.dot(h.astype(compute_dtype), w3.T.astype(compute_dtype),
                  preferred_element_type=jnp.float32) + b3
    return out


def init_params(key):
    # PyTorch Linear layout: weight (out_features, in_features), bias (out,).
    #   fc1: Linear(4, 64), fc2: Linear(64, 64), fc3: Linear(64, 3)
    k1, k2, k3, k4, k5, k6 = jax.random.split(key, 6)
    w1 = jax.random.normal(k1, (64, 4), jnp.float32) * 0.1
    b1 = jax.random.normal(k4, (64,), jnp.float32) * 0.05
    w2 = jax.random.normal(k2, (64, 64), jnp.float32) * 0.1
    b2 = jax.random.normal(k5, (64,), jnp.float32) * 0.05
    w3 = jax.random.normal(k3, (3, 64), jnp.float32) * 0.1
    b3 = jax.random.normal(k6, (3,), jnp.float32) * 0.05
    return (w1, b1, w2, b2, w3, b3)


# TODO(synk): sample_action's epsilon-greedy branch (random.random / .item()) is
# host-side control flow, not a kernel; argmax over the 3 Q-values stays in JAX.

if __name__ == "__main__":
    key = jax.random.PRNGKey(0)
    kx1, kx2, kp = jax.random.split(key, 3)

    params = init_params(kp)
    w1, b1, w2, b2, w3, b3 = params

    # Small CartPole-like batch of observations: (B, 4).
    x_small = jax.random.normal(kx1, (8, 4), jnp.float32)
    out_small = jax.block_until_ready(qnet_forward(x_small, params))

    # Larger batch exercising multi-block grid + partial trailing block
    # (B=300 -> TM=256, 2 grid steps, second block masked past row 299).
    x_big = jax.random.normal(kx2, (300, 4), jnp.float32)
    out_big = jax.block_until_ready(qnet_forward(x_big, params))

    for x, out in ((x_small, out_small), (x_big, out_big)):
        assert out.shape == (x.shape[0], NOUT)

        # Reference mirroring the kernel numerics.
        ref = qnet_forward_xla(x, params)
        err = float(jnp.max(jnp.abs(out - ref)))
        assert jnp.allclose(out, ref, atol=3e-3, rtol=3e-3), err

        # Loose check against the pure-f32 PyTorch-equivalent math.
        ref32 = jnp.maximum(x @ w1.T + b1, 0.0)
        ref32 = jnp.maximum(ref32 @ w2.T + b2, 0.0)
        ref32 = ref32 @ w3.T + b3
        assert jnp.allclose(out, ref32, atol=5e-2, rtol=5e-2)

    print("KERNEL_OK")
</pallas_src>

<mosaic_0001>
module attributes {stable_mosaic.version = 11 : i64} {
  func.func @qnet_kernel(%arg0: i32, %arg1: memref<4x8xf32, #tpu.memory_space<vmem>>, %arg2: memref<64x4xf32, #tpu.memory_space<vmem>>, %arg3: memref<64x1xf32, #tpu.memory_space<vmem>>, %arg4: memref<64x64xbf16, #tpu.memory_space<vmem>>, %arg5: memref<64x1xf32, #tpu.memory_space<vmem>>, %arg6: memref<8x64xbf16, #tpu.memory_space<vmem>>, %arg7: memref<8x1xf32, #tpu.memory_space<vmem>>, %arg8: memref<8x8xf32, #tpu.memory_space<vmem>>) attributes {dimension_semantics = [#tpu.dimension_semantics<parallel>], iteration_bounds = array<i64: 1>, scalar_prefetch = 0 : i64, scratch_operands = 0 : i64, tpu.core_type = #tpu.core_type<tc>, window_params = [{transform_indices = @transform_0, window_bounds = array<i64: 4, 8>}, {pipeline_mode = #tpu.pipeline_mode<synchronous>, transform_indices = @transform_1, window_bounds = array<i64: 64, 4>}, {pipeline_mode = #tpu.pipeline_mode<synchronous>, transform_indices = @transform_2, window_bounds = array<i64: 64, 1>}, {pipeline_mode = #tpu.pipeline_mode<synchronous>, transform_indices = @transform_3, window_bounds = array<i64: 64, 64>}, {pipeline_mode = #tpu.pipeline_mode<synchronous>, transform_indices = @transform_4, window_bounds = array<i64: 64, 1>}, {pipeline_mode = #tpu.pipeline_mode<synchronous>, transform_indices = @transform_5, window_bounds = array<i64: 8, 64>}, {pipeline_mode = #tpu.pipeline_mode<synchronous>, transform_indices = @transform_6, window_bounds = array<i64: 8, 1>}, {transform_indices = @transform_7, window_bounds = array<i64: 8, 8>}]} {
    %c0 = arith.constant 0 : index
    %c0_0 = arith.constant 0 : index
    %0 = vector.load %arg2[%c0, %c0_0] : memref<64x4xf32, #tpu.memory_space<vmem>>, vector<64x4xf32>
    %c0_1 = arith.constant 0 : index
    %c0_2 = arith.constant 0 : index
    %1 = vector.load %arg1[%c0_1, %c0_2] : memref<4x8xf32, #tpu.memory_space<vmem>>, vector<4x8xf32>
    %cst = arith.constant dense<0.000000e+00> : vector<64x8xf32>
    %2 = tpu.matmul %0, %1, %cst {dimension_numbers = #tpu.dot_dimension_numbers<[1], [0], [0], [1], [0, 0, 1, 1], [], []>} : vector<64x4xf32>, vector<4x8xf32>, vector<64x8xf32> -> vector<64x8xf32>
    %c0_3 = arith.constant 0 : index
    %c0_4 = arith.constant 0 : index
    %3 = vector.load %arg3[%c0_3, %c0_4] : memref<64x1xf32, #tpu.memory_space<vmem>>, vector<64x1xf32>
    %4 = vector.broadcast %3 : vector<64x1xf32> to vector<64x8xf32>
    %5 = arith.addf %2, %4 : vector<64x8xf32>
    %cst_5 = arith.constant 0.000000e+00 : f32
    %6 = vector.broadcast %cst_5 : f32 to vector<64x8xf32>
    %7 = arith.maximumf %5, %6 : vector<64x8xf32>
    %c0_6 = arith.constant 0 : index
    %c0_7 = arith.constant 0 : index
    %8 = vector.load %arg4[%c0_6, %c0_7] : memref<64x64xbf16, #tpu.memory_space<vmem>>, vector<64x64xbf16>
    %9 = arith.truncf %7 : vector<64x8xf32> to vector<64x8xbf16>
    %cst_8 = arith.constant dense<0.000000e+00> : vector<64x8xf32>
    %10 = tpu.matmul %8, %9, %cst_8 {dimension_numbers = #tpu.dot_dimension_numbers<[1], [0], [0], [1], [0, 0, 1, 1], [], []>} : vector<64x64xbf16>, vector<64x8xbf16>, vector<64x8xf32> -> vector<64x8xf32>
    %c0_9 = arith.constant 0 : index
    %c0_10 = arith.constant 0 : index
    %11 = vector.load %arg5[%c0_9, %c0_10] : memref<64x1xf32, #tpu.memory_space<vmem>>, vector<64x1xf32>
    %12 = vector.broadcast %11 : vector<64x1xf32> to vector<64x8xf32>
    %13 = arith.addf %10, %12 : vector<64x8xf32>
    %cst_11 = arith.constant 0.000000e+00 : f32
    %14 = vector.broadcast %cst_11 : f32 to vector<64x8xf32>
    %15 = arith.maximumf %13, %14 : vector<64x8xf32>
    %c0_12 = arith.constant 0 : index
    %c0_13 = arith.constant 0 : index
    %16 = vector.load %arg6[%c0_12, %c0_13] : memref<8x64xbf16, #tpu.memory_space<vmem>>, vector<8x64xbf16>
    %17 = arith.truncf %15 : vector<64x8xf32> to vector<64x8xbf16>
    %cst_14 = arith.constant dense<0.000000e+00> : vector<8x8xf32>
    %18 = tpu.matmul %16, %17, %cst_14 {dimension_numbers = #tpu.dot_dimension_numbers<[1], [0], [0], [1], [0, 0, 1, 1], [], []>} : vector<8x64xbf16>, vector<64x8xbf16>, vector<8x8xf32> -> vector<8x8xf32>
    %c0_15 = arith.constant 0 : index
    %c0_16 = arith.constant 0 : index
    %19 = vector.load %arg7[%c0_15, %c0_16] : memref<8x1xf32, #tpu.memory_space<vmem>>, vector<8x1xf32>
    %20 = vector.broadcast %19 : vector<8x1xf32> to vector<8x8xf32>
    %21 = arith.addf %18, %20 : vector<8x8xf32>
    %c0_17 = arith.constant 0 : index
    %c0_18 = arith.constant 0 : index
    %22 = vector.load %arg8[%c0_17, %c0_18] : memref<8x8xf32, #tpu.memory_space<vmem>>, vector<8x8xf32>
    tpu.vector_store %arg8[%c0_17, %c0_18], %21 {strides = array<i32>} : memref<8x8xf32, #tpu.memory_space<vmem>>, vector<8x8xf32>,
    return
  }
  func.func @transform_0(%arg0: i32) -> (i32, i32) {
    %c0_i32 = arith.constant 0 : i32
    %c0_i32_0 = arith.constant 0 : i32
    return %c0_i32, %arg0 : i32, i32
  }
  func.func @transform_1(%arg0: i32) -> (i32, i32) {
    %c0_i32 = arith.constant 0 : i32
    %c0_i32_0 = arith.constant 0 : i32
    %c0_i32_1 = arith.constant 0 : i32
    return %c0_i32, %c0_i32_0 : i32, i32
  }
  func.func @transform_2(%arg0: i32) -> (i32, i32) {
    %c0_i32 = arith.constant 0 : i32
    %c0_i32_0 = arith.constant 0 : i32
    %c0_i32_1 = arith.constant 0 : i32
    return %c0_i32, %c0_i32_0 : i32, i32
  }
  func.func @transform_3(%arg0: i32) -> (i32, i32) {
    %c0_i32 = arith.constant 0 : i32
    %c0_i32_0 = arith.constant 0 : i32
    %c0_i32_1 = arith.constant 0 : i32
    return %c0_i32, %c0_i32_0 : i32, i32
  }
  func.func @transform_4(%arg0: i32) -> (i32, i32) {
    %c0_i32 = arith.constant 0 : i32
    %c0_i32_0 = arith.constant 0 : i32
    %c0_i32_1 = arith.constant 0 : i32
    return %c0_i32, %c0_i32_0 : i32, i32
  }
  func.func @transform_5(%arg0: i32) -> (i32, i32) {
    %c0_i32 = arith.constant 0 : i32
    %c0_i32_0 = arith.constant 0 : i32
    %c0_i32_1 = arith.constant 0 : i32
    return %c0_i32, %c0_i32_0 : i32, i32
  }
  func.func @transform_6(%arg0: i32) -> (i32, i32) {
    %c0_i32 = arith.constant 0 : i32
    %c0_i32_0 = arith.constant 0 : i32
    %c0_i32_1 = arith.constant 0 : i32
    return %c0_i32, %c0_i32_0 : i32, i32
  }
  func.func @transform_7(%arg0: i32) -> (i32, i32) {
    %c0_i32 = arith.constant 0 : i32
    %c0_i32_0 = arith.constant 0 : i32
    return %c0_i32, %arg0 : i32, i32
  }
}

</mosaic_0001>

<llo_original>
// kernel: tpu_custom_call.1
$region0: #{tpu_custom_call.1}
  #allocation0 [shape = 'u32[]', space=smem, size = 0x4, offset = 0x4, fixed_abs, tag = 'smem constant byte address 0x4 - core index']
  #allocation1 [shape = 'u32[144,128]{1,0:T(1,128)}', space=vmem, size = 0x12000, scoped, tag = 'internal scratch']
  %s0 = inlined_call_operand.vmem [shape: f32[4,8], index: 0, kind: input, shape index: {}]
  %s1 = inlined_call_operand.vmem [shape: f32[64,4], index: 1, kind: input, shape index: {}]
  %s2 = inlined_call_operand.vmem [shape: f32[64,1], index: 2, kind: input, shape index: {}]
  %s3 = inlined_call_operand.vmem [shape: bf16[64,64], index: 3, kind: input, shape index: {}]
  %s4 = inlined_call_operand.vmem [shape: f32[64,1], index: 4, kind: input, shape index: {}]
  %s5 = inlined_call_operand.vmem [shape: bf16[8,64], index: 5, kind: input, shape index: {}]
  %s6 = inlined_call_operand.vmem [shape: f32[8,1], index: 6, kind: input, shape index: {}]
  %s7 = inlined_call_operand.hbm [shape: f32[8,8], index: 7, kind: output, shape index: {}]
  %s8 = sld [smem:[#allocation0]]
  $region38: #{tpu_custom_call.1} parent=0
    _
  %s10 = ssub.s32 1, %s8
  %s11 = scalar_select 0, %s10, %s8
  $region1: #{tpu_custom_call.1} parent=0
    #allocation2 [shape = 'u8[4096]{0}', space=vmem, size = 0x1000, scoped, tag = 'output window, operand 0, single buffered']
    #allocation3 [shape = 's32[1]{0}', space=sflag, size = 0x4, scoped, tag = 'scoped memory for tpu_custom_call.1']
    %12 = vsyncpa [#allocation3], 0
    // Predicated region
    $region2: #{tpu_custom_call.1} parent=1 // pred_check
      _
    $region3: #{tpu_custom_call.1} parent=1 // pred_check_branch
      %14 = sbr.rel (0) target = $region5
    $region4: #{tpu_custom_call.1} parent=1 // pred_region
      _
    $region5: #{tpu_custom_call.1} parent=1 // pred_fallthru
      _
    // Predicated region
    $region6: #{tpu_custom_call.1} parent=1 // pred_check
      _
    $region7: #{tpu_custom_call.1} parent=1 // pred_check_branch
      %16 = sbr.rel (0) target = $region9
    $region8: #{tpu_custom_call.1} parent=1 // pred_region
      _
    $region9: #{tpu_custom_call.1} parent=1 // pred_fallthru
      _
    // Predicated region
    $region10: #{tpu_custom_call.1} parent=1 // pred_check
      _
    $region11: #{tpu_custom_call.1} parent=1 // pred_check_branch
      %18 = sbr.rel (0) target = $region13
    $region12: #{tpu_custom_call.1} parent=1 // pred_region
      _
    $region13: #{tpu_custom_call.1} parent=1 // pred_fallthru
      _
    // Predicated region
    $region14: #{tpu_custom_call.1} parent=1 // pred_check
      _
    $region15: #{tpu_custom_call.1} parent=1 // pred_check_branch
      %20 = sbr.rel (0) target = $region17
    $region16: #{tpu_custom_call.1} parent=1 // pred_region
      _
    $region17: #{tpu_custom_call.1} parent=1 // pred_fallthru
      _
    // Predicated region
    $region18: #{tpu_custom_call.1} parent=1 // pred_check
      _
    $region19: #{tpu_custom_call.1} parent=1 // pred_check_branch
      %22 = sbr.rel (0) target = $region21
    $region20: #{tpu_custom_call.1} parent=1 // pred_region
      _
    $region21: #{tpu_custom_call.1} parent=1 // pred_fallthru
      _
    // Predicated region
    $region22: #{tpu_custom_call.1} parent=1 // pred_check
      _
    $region23: #{tpu_custom_call.1} parent=1 // pred_check_branch
      %24 = sbr.rel (0) target = $region25
    $region24: #{tpu_custom_call.1} parent=1 // pred_region
      _
    $region25: #{tpu_custom_call.1} parent=1 // pred_fallthru
      _
    // Predicated region
    $region26: #{tpu_custom_call.1} parent=1 // pred_check
      _
    $region27: #{tpu_custom_call.1} parent=1 // pred_check_branch
      %26 = sbr.rel (0) target = $region29
    $region28: #{tpu_custom_call.1} parent=1 // pred_region
      _
    $region29: #{tpu_custom_call.1} parent=1 // pred_fallthru
      _
    %v28 = vld [vmem:[%s1] sm:$0xff]
    %v29 = vld [vmem:[%s1 + $0x8] sm:$0xff]
    %v30 = vld [vmem:[%s1 + $0x10] sm:$0xff]
    %v31 = vld [vmem:[%s1 + $0x18] sm:$0xff]
    %v32 = vld [vmem:[%s1 + $0x20] sm:$0xff]
    %v33 = vld [vmem:[%s1 + $0x28] sm:$0xff]
    %v34 = vld [vmem:[%s1 + $0x30] sm:$0xff]
    %v35 = vld [vmem:[%s1 + $0x38] sm:$0xff]
    %v36 = vld [vmem:[%s0] sm:$0xf]
    %v37 = vld [vmem:[%s2] sm:$0xff]
    %v38 = vld [vmem:[%s2 + $0x8] sm:$0xff]
    %v39 = vld [vmem:[%s2 + $0x10] sm:$0xff]
    %v40 = vld [vmem:[%s2 + $0x18] sm:$0xff]
    %v41 = vld [vmem:[%s2 + $0x20] sm:$0xff]
    %v42 = vld [vmem:[%s2 + $0x28] sm:$0xff]
    %v43 = vld [vmem:[%s2 + $0x30] sm:$0xff]
    %v44 = vld [vmem:[%s2 + $0x38] sm:$0xff]
    %46 = vset.pattern.permute.xlu0 0
    %47 = vperm.xlu0 %46, %v37
    %v48 = vpop.permute.xlu0 %47
    %51 = vset.pattern.permute.xlu0 0
    %52 = vperm.xlu0 %51, %v38
    %v53 = vpop.permute.xlu0 %52
    %56 = vset.pattern.permute.xlu0 0
    %57 = vperm.xlu0 %56, %v39
    %v58 = vpop.permute.xlu0 %57
    %61 = vset.pattern.permute.xlu0 0
    %62 = vperm.xlu0 %61, %v40
    %v63 = vpop.permute.xlu0 %62
    %66 = vset.pattern.permute.xlu0 0
    %67 = vperm.xlu0 %66, %v41
    %v68 = vpop.permute.xlu0 %67
    %71 = vset.pattern.permute.xlu0 0
    %72 = vperm.xlu0 %71, %v42
    %v73 = vpop.permute.xlu0 %72
    %76 = vset.pattern.permute.xlu0 0
    %77 = vperm.xlu0 %76, %v43
    %v78 = vpop.permute.xlu0 %77
    %81 = vset.pattern.permute.xlu0 0
    %82 = vperm.xlu0 %81, %v44
    %v83 = vpop.permute.xlu0 %82
    %vm85 = vcmask 31744
    %v87 = vsel %vm85, %v28, 0
    %v90 = vsel %vm85, %v29, 0
    %v93 = vsel %vm85, %v30, 0
    %v96 = vsel %vm85, %v31, 0
    %v99 = vsel %vm85, %v32, 0
    %v102 = vsel %vm85, %v33, 0
    %v105 = vsel %vm85, %v34, 0
    %v108 = vsel %vm85, %v35, 0
    %vm110 = vcmask 1043456
    %v112 = vsel %vm110, %v36, 0
    %114 = vmatprep.subr.mxu0 0.0
    %115 = vmatpush1.msra.mxu0 0.0
    %116 = vmatprep.subr.mxu0 0.0
    %117 = vmatpush1.msra.mxu0 0.0
    %118 = vmatprep.subr.mxu0 0.0
    %119 = vmatpush1.msra.mxu0 0.0
    %120 = vmatprep.subr.mxu0 0.0
    %121 = vmatpush1.msra.mxu0 0.0
    %122 = vmatprep.subr.mxu0 0.0
    %123 = vmatpush1.msra.mxu0 0.0
    %124 = vmatprep.subr.mxu0 0.0
    %125 = vmatpush1.msra.mxu0 0.0
    %126 = vmatprep.subr.mxu0 0.0
    %127 = vmatpush1.msra.mxu0 0.0
    %128 = vmatprep.subr.mxu0 0.0
    %129 = vmatpush1.msra.mxu0 0.0
    %130 = vmatprep.subr.mxu0 0.0
    %131 = vmatpush1.msra.mxu0 0.0
    %132 = vmatprep.subr.mxu0 0.0
    %133 = vmatpush1.msra.mxu0 0.0
    %134 = vmatprep.subr.mxu0 0.0
    %135 = vmatpush1.msra.mxu0 0.0
    %136 = vmatprep.subr.mxu0 0.0
    %137 = vmatpush1.msra.mxu0 0.0
    %138 = vmatprep.subr.mxu0 0.0
    %139 = vmatpush1.msra.mxu0 0.0
    %140 = vmatprep.subr.mxu0 0.0
    %141 = vmatpush1.msra.mxu0 0.0
    %142 = vmatprep.subr.mxu0 0.0
    %143 = vmatpush1.msra.mxu0 0.0
    %144 = vmatprep.subr.mxu0 0.0
    %145 = vmatpush1.msra.mxu0 %v112
    %146 = vmatprep.subr.mxu0 0.0
    %147 = vmatpush2.msra.mxu0 0.0
    %148 = vmatprep.subr.mxu0 0.0
    %149 = vmatpush2.msra.mxu0 0.0
    %150 = vmatprep.subr.mxu0 0.0
    %151 = vmatpush2.msra.mxu0 0.0
    %152 = vmatprep.subr.mxu0 0.0
    %153 = vmatpush2.msra.mxu0 0.0
    %154 = vmatprep.subr.mxu0 0.0
    %155 = vmatpush2.msra.mxu0 0.0
    %156 = vmatprep.subr.mxu0 0.0
    %157 = vmatpush2.msra.mxu0 0.0
    %158 = vmatprep.subr.mxu0 0.0
    %159 = vmatpush2.msra.mxu0 0.0
    %160 = vmatprep.subr.mxu0 0.0
    %161 = vmatpush2.msra.mxu0 0.0
    %162 = vmatprep.subr.mxu0 0.0
    %163 = vmatpush2.msra.mxu0 0.0
    %164 = vmatprep.subr.mxu0 0.0
    %165 = vmatpush2.msra.mxu0 0.0
    %166 = vmatprep.subr.mxu0 0.0
    %167 = vmatpush2.msra.mxu0 0.0
    %168 = vmatprep.subr.mxu0 0.0
    %169 = vmatpush2.msra.mxu0 0.0
    %170 = vmatprep.subr.mxu0 0.0
    %171 = vmatpush2.msra.mxu0 0.0
    %172 = vmatprep.subr.mxu0 0.0
    %173 = vmatpush2.msra.mxu0 0.0
    %174 = vmatprep.subr.mxu0 0.0
    %175 = vmatpush2.msra.mxu0 0.0
    %176 = vmatprep.subr.mxu0 0.0
    %177 = vmatpush2.msra.mxu0 0.0
    %178 = vmatprep.mubr.f32.mxu0 0.0
    %179 = vmatmul.mubr.f32.gmra.mxu0 %v87
    %v180 = vpop.f32.mrf.mxu0
    %v181 = vadd.f32 %v48, %v180
    %v182 = vpop.f32.mrf.mxu0
    %183 = vmatprep.mubr.f32.mxu0 0.0
    %184 = vmatmul.mubr.f32.gmra.mxu0 %v90
    %v185 = vpop.f32.mrf.mxu0
    %v186 = vadd.f32 %v53, %v185
    %v187 = vpop.f32.mrf.mxu0
    %188 = vmatprep.mubr.f32.mxu0 0.0
    %189 = vmatmul.mubr.f32.gmra.mxu0 %v93
    %v190 = vpop.f32.mrf.mxu0
    %v191 = vadd.f32 %v58, %v190
    %v192 = vpop.f32.mrf.mxu0
    %193 = vmatprep.mubr.f32.mxu0 0.0
    %194 = vmatmul.mubr.f32.gmra.mxu0 %v96
    %v195 = vpop.f32.mrf.mxu0
    %v196 = vadd.f32 %v63, %v195
    %v197 = vpop.f32.mrf.mxu0
    %198 = vmatprep.mubr.f32.mxu0 0.0
    %199 = vmatmul.mubr.f32.gmra.mxu0 %v99
    %v200 = vpop.f32.mrf.mxu0
    %v201 = vadd.f32 %v68, %v200
    %v202 = vpop.f32.mrf.mxu0
    %203 = vmatprep.mubr.f32.mxu0 0.0
    %204 = vmatmul.mubr.f32.gmra.mxu0 %v102
    %v205 = vpop.f32.mrf.mxu0
    %v206 = vadd.f32 %v73, %v205
    %v207 = vpop.f32.mrf.mxu0
    %208 = vmatprep.mubr.f32.mxu0 0.0
    %209 = vmatmul.mubr.f32.gmra.mxu0 %v105
    %v210 = vpop.f32.mrf.mxu0
    %v211 = vadd.f32 %v78, %v210
    %v212 = vpop.f32.mrf.mxu0
    %213 = vmatprep.mubr.f32.mxu0 0.0
    %214 = vmatmul.mubr.f32.gmra.mxu0 %v108
    %v215 = vpop.f32.mrf.mxu0
    %v216 = vadd.f32 %v83, %v215
    %v217 = vpop.f32.mrf.mxu0
    %218 = vdwg.mxu0
    %v219 = vmax.f32 %v181, 0.0
    %v220 = vmax.f32 %v186, 0.0
    %v221 = vmax.f32 %v191, 0.0
    %v222 = vmax.f32 %v196, 0.0
    %v223 = vmax.f32 %v201, 0.0
    %v224 = vmax.f32 %v206, 0.0
    %v225 = vmax.f32 %v211, 0.0
    %v226 = vmax.f32 %v216, 0.0
    %v227 = vld [vmem:[%s3] sm:$0xf]
    %v228 = vld [vmem:[%s3 + $0x4] sm:$0xf]
    %v229 = vld [vmem:[%s3 + $0x8] sm:$0xf]
    %v230 = vld [vmem:[%s3 + $0xc] sm:$0xf]
    %v231 = vld [vmem:[%s3 + $0x10] sm:$0xf]
    %v232 = vld [vmem:[%s3 + $0x14] sm:$0xf]
    %v233 = vld [vmem:[%s3 + $0x18] sm:$0xf]
    %v234 = vld [vmem:[%s3 + $0x1c] sm:$0xf]
    %v235 = vpack.c.bf16 %v220, %v219
    %v236 = vpack.c.bf16 %v222, %v221
    %v237 = vpack.c.bf16 %v224, %v223
    %v238 = vpack.c.bf16 %v226, %v225
    %v239 = vld [vmem:[%s4] sm:$0xff]
    %v240 = vld [vmem:[%s4 + $0x8] sm:$0xff]
    %v241 = vld [vmem:[%s4 + $0x10] sm:$0xff]
    %v242 = vld [vmem:[%s4 + $0x18] sm:$0xff]
    %v243 = vld [vmem:[%s4 + $0x20] sm:$0xff]
    %v244 = vld [vmem:[%s4 + $0x28] sm:$0xff]
    %v245 = vld [vmem:[%s4 + $0x30] sm:$0xff]
    %v246 = vld [vmem:[%s4 + $0x38] sm:$0xff]
    %248 = vset.pattern.permute.xlu0 0
    %249 = vperm.xlu0 %248, %v239
    %v250 = vpop.permute.xlu0 %249
    %253 = vset.pattern.permute.xlu0 0
    %254 = vperm.xlu0 %253, %v240
    %v255 = vpop.permute.xlu0 %254
    %258 = vset.pattern.permute.xlu0 0
    %259 = vperm.xlu0 %258, %v241
    %v260 = vpop.permute.xlu0 %259
    %263 = vset.pattern.permute.xlu0 0
    %264 = vperm.xlu0 %263, %v242
    %v265 = vpop.permute.xlu0 %264
    %268 = vset.pattern.permute.xlu0 0
    %269 = vperm.xlu0 %268, %v243
    %v270 = vpop.permute.xlu0 %269
    %273 = vset.pattern.permute.xlu0 0
    %274 = vperm.xlu0 %273, %v244
    %v275 = vpop.permute.xlu0 %274
    %278 = vset.pattern.permute.xlu0 0
    %279 = vperm.xlu0 %278, %v245
    %v280 = vpop.permute.xlu0 %279
    %283 = vset.pattern.permute.xlu0 0
    %284 = vperm.xlu0 %283, %v246
    %v285 = vpop.permute.xlu0 %284
    %v295 = vunpack.c.l.b16 %v227
    %v296 = vunpack.c.l.b16 %v228
    %v297 = vunpack.c.l.b16 %v229
    %v298 = vunpack.c.l.b16 %v230
    %v299 = vunpack.c.l.b16 %v231
    %v300 = vunpack.c.l.b16 %v232
    %v301 = vunpack.c.l.b16 %v233
    %v302 = vunpack.c.l.b16 %v234
    %v303 = vpack.c.b16 %v296, %v295
    %v304 = vpack.c.b16 %v298, %v297
    %v305 = vpack.c.b16 %v300, %v299
    %v306 = vpack.c.b16 %v302, %v301
    %vm307 = vcmask 523264
    %v309 = vsel %vm307, %v303, 0
    %v312 = vsel %vm307, %v304, 0
    %v315 = vsel %vm307, %v305, 0
    %v318 = vsel %vm307, %v306, 0
    %320 = vmatprep.subr.bf16.mxu0 0
    %321 = vmatpush1.bf16.msra.mxu0 0
    %322 = vmatprep.subr.bf16.mxu0 0
    %323 = vmatpush1.bf16.msra.mxu0 0
    %324 = vmatprep.subr.bf16.mxu0 0
    %325 = vmatpush1.bf16.msra.mxu0 0
    %326 = vmatprep.subr.bf16.mxu0 0
    %327 = vmatpush1.bf16.msra.mxu0 0
    %328 = vmatprep.subr.bf16.mxu0 0
    %329 = vmatpush1.bf16.msra.mxu0 %v238
    %330 = vmatprep.subr.bf16.mxu0 0
    %331 = vmatpush1.bf16.msra.mxu0 %v237
    %332 = vmatprep.subr.bf16.mxu0 0
    %333 = vmatpush1.bf16.msra.mxu0 %v236
    %334 = vmatprep.subr.bf16.mxu0 0
    %335 = vmatpush1.bf16.msra.mxu0 %v235
    %336 = vmatprep.subr.bf16.mxu0 0
    %337 = vmatpush2.bf16.msra.mxu0 0
    %338 = vmatprep.subr.bf16.mxu0 0
    %339 = vmatpush2.bf16.msra.mxu0 0
    %340 = vmatprep.subr.bf16.mxu0 0
    %341 = vmatpush2.bf16.msra.mxu0 0
    %342 = vmatprep.subr.bf16.mxu0 0
    %343 = vmatpush2.bf16.msra.mxu0 0
    %344 = vmatprep.subr.bf16.mxu0 0
    %345 = vmatpush2.bf16.msra.mxu0 0
    %346 = vmatprep.subr.bf16.mxu0 0
    %347 = vmatpush2.bf16.msra.mxu0 0
    %348 = vmatprep.subr.bf16.mxu0 0
    %349 = vmatpush2.bf16.msra.mxu0 0
    %350 = vmatprep.subr.bf16.mxu0 0
    %351 = vmatpush2.bf16.msra.mxu0 0
    %352 = vmatprep.mubr.bf16.mxu0 0
    %353 = vmatmul.mubr.bf16.gmra.mxu0 %v309
    %v354 = vpop.f32.mrf.mxu0
    %v355 = vadd.f32 %v250, %v354
    %v356 = vpop.f32.mrf.mxu0
    %v357 = vpop.f32.mrf.mxu0
    %v358 = vadd.f32 %v255, %v357
    %v359 = vpop.f32.mrf.mxu0
    %360 = vmatprep.mubr.bf16.mxu0 0
    %361 = vmatmul.mubr.bf16.gmra.mxu0 %v312
    %v362 = vpop.f32.mrf.mxu0
    %v363 = vadd.f32 %v260, %v362
    %v364 = vpop.f32.mrf.mxu0
    %v365 = vpop.f32.mrf.mxu0
    %v366 = vadd.f32 %v265, %v365
    %v367 = vpop.f32.mrf.mxu0
    %368 = vmatprep.mubr.bf16.mxu0 0
    %369 = vmatmul.mubr.bf16.gmra.mxu0 %v315
    %v370 = vpop.f32.mrf.mxu0
    %v371 = vadd.f32 %v270, %v370
    %v372 = vpop.f32.mrf.mxu0
    %v373 = vpop.f32.mrf.mxu0
    %v374 = vadd.f32 %v275, %v373
    %v375 = vpop.f32.mrf.mxu0
    %376 = vmatprep.mubr.bf16.mxu0 0
    %377 = vmatmul.mubr.bf16.gmra.mxu0 %v318
    %v378 = vpop.f32.mrf.mxu0
    %v379 = vadd.f32 %v280, %v378
    %v380 = vpop.f32.mrf.mxu0
    %v381 = vpop.f32.mrf.mxu0
    %v382 = vadd.f32 %v285, %v381
    %v383 = vpop.f32.mrf.mxu0
    %384 = vdwg.mxu0
    %v385 = vmax.f32 %v355, 0.0
    %v386 = vmax.f32 %v358, 0.0
    %v387 = vmax.f32 %v363, 0.0
    %v388 = vmax.f32 %v366, 0.0
    %v389 = vmax.f32 %v371, 0.0
    %v390 = vmax.f32 %v374, 0.0
    %v391 = vmax.f32 %v379, 0.0
    %v392 = vmax.f32 %v382, 0.0
    %v393 = vld [vmem:[%s5] sm:$0xf]
    %v394 = vpack.c.bf16 %v386, %v385
    %v395 = vpack.c.bf16 %v388, %v387
    %v396 = vpack.c.bf16 %v390, %v389
    %v397 = vpack.c.bf16 %v392, %v391
    %v398 = vld [vmem:[%s6] sm:$0xff]
    %400 = vset.pattern.permute.xlu0 0
    %401 = vperm.xlu0 %400, %v398
    %v402 = vpop.permute.xlu0 %401
    %v405 = vsel %vm307, %v393, 0
    %407 = vmatprep.subr.bf16.mxu0 0
    %408 = vmatpush1.bf16.msra.mxu0 0
    %409 = vmatprep.subr.bf16.mxu0 0
    %410 = vmatpush1.bf16.msra.mxu0 0
    %411 = vmatprep.subr.bf16.mxu0 0
    %412 = vmatpush1.bf16.msra.mxu0 0
    %413 = vmatprep.subr.bf16.mxu0 0
    %414 = vmatpush1.bf16.msra.mxu0 0
    %415 = vmatprep.subr.bf16.mxu0 0
    %416 = vmatpush1.bf16.msra.mxu0 %v397
    %417 = vmatprep.subr.bf16.mxu0 0
    %418 = vmatpush1.bf16.msra.mxu0 %v396
    %419 = vmatprep.subr.bf16.mxu0 0
    %420 = vmatpush1.bf16.msra.mxu0 %v395
    %421 = vmatprep.subr.bf16.mxu0 0
    %422 = vmatpush1.bf16.msra.mxu0 %v394
    %423 = vmatprep.subr.bf16.mxu0 0
    %424 = vmatpush2.bf16.msra.mxu0 0
    %425 = vmatprep.subr.bf16.mxu0 0
    %426 = vmatpush2.bf16.msra.mxu0 0
    %427 = vmatprep.subr.bf16.mxu0 0
    %428 = vmatpush2.bf16.msra.mxu0 0
    %429 = vmatprep.subr.bf16.mxu0 0
    %430 = vmatpush2.bf16.msra.mxu0 0
    %431 = vmatprep.subr.bf16.mxu0 0
    %432 = vmatpush2.bf16.msra.mxu0 0
    %433 = vmatprep.subr.bf16.mxu0 0
    %434 = vmatpush2.bf16.msra.mxu0 0
    %435 = vmatprep.subr.bf16.mxu0 0
    %436 = vmatpush2.bf16.msra.mxu0 0
    %437 = vmatprep.subr.bf16.mxu0 0
    %438 = vmatpush2.bf16.msra.mxu0 0
    %439 = vmatprep.mubr.bf16.mxu0 0
    %440 = vmatmul.mubr.bf16.gmra.mxu0 %v405
    %v441 = vpop.f32.mrf.mxu0
    %v442 = vadd.f32 %v402, %v441
    %v443 = vpop.f32.mrf.mxu0
    %v444 = vpop.f32.mrf.mxu0
    %v445 = vpop.f32.mrf.mxu0
    %446 = vdwg.mxu0
    %vm447 = vcmask 64512
    %448 = vst.msk [vmem:[#allocation2] sm:$0xff] %vm447, %v442
    // Predicated region
    $region30: #{tpu_custom_call.1} parent=1 // pred_check
      _
    $region31: #{tpu_custom_call.1} parent=1 // pred_check_branch
      %450 = sbr.rel (0) target = $region33
    $region32: #{tpu_custom_call.1} parent=1 // pred_region
      %s452 = ssub.s32 128, 128
      %453 = vsyncadd [#allocation3], %s452
      %s455 = sshll.u32 [#allocation2], 4
      %s456 = int_to_ptr.vmem [resolvable:$true] %s455
      %458 = dma.vmem_to_hbm [thread:$0]  %s456, 128, %s7, [#allocation3]
    $region33: #{tpu_custom_call.1} parent=1 // pred_fallthru
      _
    // Predicated region
    $region34: #{tpu_custom_call.1} parent=1 // pred_check
      _
    $region35: #{tpu_custom_call.1} parent=1 // pred_check_branch
      %460 = sbr.rel (0) target = $region37
    $region36: #{tpu_custom_call.1} parent=1 // pred_region
      %461 = dma.done [#allocation3], 128
    $region37: #{tpu_custom_call.1} parent=1 // pred_fallthru
      _
    %462 = vsyncpa [#allocation3], 1

</llo_original>
